<compile_context>
chip_gen: v5e
topology: v5e:2x2
jax: 0.10.0
libtpu: 0.0.40
codegen_flags: <defaults>
</compile_context>

<pallas_src>
import functools

import jax
import jax.numpy as jnp
from jax.experimental import pallas as pl
from jax.experimental.pallas import tpu as pltpu


# ----------------------------------------------------------------------------
# Fused Pallas matmul kernel:  y = act((X @ W) + bias)
# ----------------------------------------------------------------------------
def _matmul_kernel(x_ref, w_ref, b_ref, o_ref, acc_ref, *, act):
    @pl.when(pl.program_id(2) == 0)
    def _():
        acc_ref[...] = jnp.zeros_like(acc_ref)

    acc_ref[...] += jnp.dot(x_ref[...], w_ref[...],
                            preferred_element_type=jnp.float32)

    @pl.when(pl.program_id(2) == pl.num_programs(2) - 1)
    def _():
        y = acc_ref[...] + b_ref[...]
        if act:  # SiLU: y * sigmoid(y); reciprocal goes to the EUP slot
            y = y * pl.reciprocal(1.0 + jnp.exp(-y), approx=True)
        o_ref[...] = y.astype(o_ref.dtype)


def _round_up(v, m):
    return (v + m - 1) // m * m


def _pick_tile(padded, cap, granule):
    """Largest tile <= cap, multiple of `granule`, dividing `padded`."""
    t = min(padded, cap)
    t -= t % granule
    t = max(t, granule)
    while padded % t:
        t -= granule
    return t


def fused_matmul(x, w, bias, n_out, act, out_dtype=jnp.bfloat16):
    """x:(M,K) float. w:(Kp,Np) bf16 pre-padded. bias:(1,Np) f32. -> (M,n_out)."""
    M, K = x.shape
    Kp, Np = w.shape
    Mp = _round_up(M, 16)

    xp = x.astype(jnp.bfloat16)
    if Mp != M or Kp != K:
        xp = jnp.pad(xp, ((0, Mp - M), (0, Kp - K)))

    tm = _pick_tile(Mp, 256, 16)     # 256 fills the v6e/v7x MXU; fine on v5e
    tk = _pick_tile(Kp, 512, 128)
    tn = _pick_tile(Np, 256, 128)

    out = pl.pallas_call(
        functools.partial(_matmul_kernel, act=act),
        out_shape=jax.ShapeDtypeStruct((Mp, Np), out_dtype),
        grid_spec=pltpu.PrefetchScalarGridSpec(
            num_scalar_prefetch=0,
            grid=(Mp // tm, Np // tn, Kp // tk),
            in_specs=[
                pl.BlockSpec((tm, tk), lambda i, j, k: (i, k)),
                pl.BlockSpec((tk, tn), lambda i, j, k: (k, j)),
                pl.BlockSpec((1, tn), lambda i, j, k: (0, j)),
            ],
            out_specs=pl.BlockSpec((tm, tn), lambda i, j, k: (i, j)),
            scratch_shapes=[pltpu.VMEM((tm, tn), jnp.float32)],
        ),
        compiler_params=pltpu.CompilerParams(
            dimension_semantics=("parallel", "parallel", "arbitrary")),
    )(xp, w, bias)
    return out[:M, :n_out]


# ----------------------------------------------------------------------------
# Layer wrappers (im2col / pooling / resize kept as cheap JAX glue, in bf16)
# ----------------------------------------------------------------------------
def conv_fwd(p, x, stride=1, act=True, out_dtype=jnp.bfloat16):
    """Conv2d(bias=False, pad=k//2) + folded BN + SiLU, NHWC input."""
    k = p["k"]
    N, H, W, C = x.shape
    xb = x.astype(jnp.bfloat16)
    if k == 1:
        if stride != 1:
            xb = xb[:, ::stride, ::stride, :]
        Ho, Wo = xb.shape[1], xb.shape[2]
        patches = xb
    else:
        pad = k // 2
        xpd = jnp.pad(xb, ((0, 0), (pad, pad), (pad, pad), (0, 0)))
        Ho = (H + 2 * pad - k) // stride + 1
        Wo = (W + 2 * pad - k) // stride + 1
        cols = []
        for dy in range(k):
            for dx in range(k):
                cols.append(xpd[:, dy:dy + (Ho - 1) * stride + 1:stride,
                                dx:dx + (Wo - 1) * stride + 1:stride, :])
        # NOTE: K layout is tap-major [dy, dx, C]; real PyTorch OIHW weights
        # would need a (kh, kw, cin, cout) transpose before flattening.
        patches = jnp.concatenate(cols, axis=-1)
    y = fused_matmul(patches.reshape(N * Ho * Wo, -1),
                     p["w"], p["bias"], p["n"], act=act, out_dtype=out_dtype)
    return y.reshape(N, Ho, Wo, p["n"])


def mlp_fwd(p, x, out_dtype=jnp.bfloat16):
    """SegFormer MLP: per-pixel Linear (no activation)."""
    N, H, W, C = x.shape
    y = fused_matmul(x.reshape(-1, C), p["w"], p["bias"], p["n"],
                     act=False, out_dtype=out_dtype)
    return y.reshape(N, H, W, p["n"])


def maxpool2x2(x):
    N, H, W, C = x.shape
    return jnp.max(x.reshape(N, H // 2, 2, W // 2, 2, C), axis=(2, 4))


def resize_bilinear(x, size):
    # F.interpolate(mode='bilinear', align_corners=False) equivalent.
    N, _, _, C = x.shape
    return jax.image.resize(x, (N, size[0], size[1], C), method="bilinear",
                            antialias=False)


def e_elan_fwd(p, x):
    c_ = p["c_"]
    x12 = conv_fwd(p["conv12"], x)            # conv1 & conv2 column-fused
    x1, x2 = x12[..., :c_], x12[..., c_:]
    x3 = conv_fwd(p["conv4"], conv_fwd(p["conv3"], x2))
    x4 = conv_fwd(p["conv6"], conv_fwd(p["conv5"], x3))
    return conv_fwd(p["conv7"], jnp.concatenate([x1, x2, x3, x4], axis=-1))


def mpconv_fwd(p, x):
    x1 = conv_fwd(p["conv1"], maxpool2x2(x))
    x2 = conv_fwd(p["conv3"], conv_fwd(p["conv2"], x), stride=2)
    return jnp.concatenate([x1, x2], axis=-1)


def idetect_fwd(p, xs):
    na, no = p["na"], p["no"]
    outs = []
    for lp, x in zip(p["layers"], xs):
        N, H, W, C = x.shape
        # y = im * (W(x + ia) + b) -> x @ (W*im) + im*(ia @ W + b)  (pre-folded)
        y = fused_matmul(x.reshape(-1, C), lp["w"], lp["bias"], lp["n"],
                         act=False, out_dtype=jnp.float32)
        y = y.reshape(N, H, W, na, no).transpose(0, 3, 1, 2, 4)
        outs.append(y)
    return outs


# ----------------------------------------------------------------------------
# Deterministic parameter construction (weights folded, padded, bf16-cast once)
# ----------------------------------------------------------------------------
class KeyGen:
    def __init__(self, seed):
        self.key = jax.random.PRNGKey(seed)

    def __call__(self):
        self.key, k = jax.random.split(self.key)
        return k


def _pack(w, bias, k):
    """Pre-pad K/N to multiples of 128, cast W to bf16, bias to (1,Np) f32."""
    K, N = w.shape
    Kp, Np = _round_up(K, 128), _round_up(N, 128)
    wp = jnp.pad(w, ((0, Kp - K), (0, Np - N))).astype(jnp.bfloat16)
    bp = jnp.pad(bias.reshape(1, -1), ((0, 0), (0, Np - N))).astype(jnp.float32)
    return {"w": wp, "bias": bp, "k": k, "n": N}


def make_conv(kg, cin, cout, k):
    fan = cin * k * k
    w = jax.random.normal(kg(), (fan, cout), jnp.float32) / jnp.sqrt(fan)
    gamma = 1.0 + 0.05 * jax.random.normal(kg(), (cout,), jnp.float32)
    beta = 0.05 * jax.random.normal(kg(), (cout,), jnp.float32)
    mean = 0.02 * jax.random.normal(kg(), (cout,), jnp.float32)
    var = 1.0 + 0.1 * jnp.abs(jax.random.normal(kg(), (cout,), jnp.float32))
    scale = gamma / jnp.sqrt(var + 1e-3)       # BN eps=0.001 (initialize_weights)
    bias = beta - mean * scale
    return _pack(w * scale[None, :], bias, k)  # fold BN scale into W


def make_linear(kg, cin, cout):
    w = jax.random.normal(kg(), (cin, cout), jnp.float32) / jnp.sqrt(cin)
    b = 0.02 * jax.random.normal(kg(), (cout,), jnp.float32)
    return _pack(w, b, 1)


def make_elan(kg, c1, c2):
    c_ = c1 // 2
    return {
        "conv12": make_conv(kg, c1, 2 * c_, 1),   # conv1 + conv2 fused (same input)
        "conv3": make_conv(kg, c_, c_, 3),
        "conv4": make_conv(kg, c_, c_, 3),
        "conv5": make_conv(kg, c_, c_, 3),
        "conv6": make_conv(kg, c_, c_, 3),
        "conv7": make_conv(kg, 4 * c_, c2, 1),
        "c_": c_,
    }


def make_mpconv(kg, c1, c2):
    c_ = c2 // 2
    return {
        "conv1": make_conv(kg, c1, c_, 1),
        "conv2": make_conv(kg, c1, c_, 1),
        "conv3": make_conv(kg, c_, c_, 3),
    }


def make_idetect(kg, nc, ch, na=3):
    no = nc + 5
    layers = []
    for c in ch:
        w = jax.random.normal(kg(), (c, na * no), jnp.float32) / jnp.sqrt(c)
        b = 0.02 * jax.random.normal(kg(), (na * no,), jnp.float32)
        ia = 0.02 * jax.random.normal(kg(), (c,), jnp.float32)
        im = 1.0 + 0.02 * jax.random.normal(kg(), (na * no,), jnp.float32)
        w_f = w * im[None, :]                    # fold ImplicitM into W
        b_f = im * (ia @ w + b)                  # fold ImplicitA into bias
        layers.append(_pack(w_f, b_f, 1))
    return {"layers": layers, "na": na, "no": no}


def build_params(nc, seed=0):
    kg = KeyGen(seed)
    p = {}
    # backbone
    p["l1_c1"] = make_conv(kg, 3, 32, 3)
    p["l1_c2"] = make_conv(kg, 32, 64, 3)
    p["l2_c1"] = make_conv(kg, 64, 64, 3)
    p["l2_c2"] = make_conv(kg, 64, 128, 3)
    p["l2_elan"] = make_elan(kg, 128, 256)
    p["l2_c3"] = make_conv(kg, 256, 256, 1)
    p["l3_mp"] = make_mpconv(kg, 256, 256)
    p["l3_elan"] = make_elan(kg, 256, 512)
    p["l3_c"] = make_conv(kg, 512, 512, 1)
    p["l4_mp"] = make_mpconv(kg, 512, 512)
    p["l4_elan"] = make_elan(kg, 512, 1024)
    p["l4_c"] = make_conv(kg, 1024, 1024, 1)
    # neck / decoder
    p["linear_c4"] = make_linear(kg, 1024, 1024)
    p["linear_c3"] = make_linear(kg, 512, 1024)
    p["linear_c2"] = make_linear(kg, 256, 1024)
    p["linear_c1"] = make_linear(kg, 64, 1024)
    p["linear_c"] = make_linear(kg, 4096, 2048)
    p["linear_conv1"] = make_conv(kg, 2048, 1024, 1)
    p["de4_conv"] = make_conv(kg, 1024, 1024, 1)
    p["linear_c5"] = make_linear(kg, 2048, 512)
    p["de3_conv"] = make_conv(kg, 512, 512, 1)
    p["linear_c6"] = make_linear(kg, 1024, 256)
    p["de2_conv"] = make_conv(kg, 256, 256, 1)
    # da_linear_c7 + ll_linear_c7 share the same input -> one 512->128 matmul
    p["seg_c7"] = make_linear(kg, 512, 128)
    # da_de1_conv + ll_de1_conv both consume c1 -> one 64->128 conv
    p["seg_de1"] = make_conv(kg, 64, 128, 1)
    p["da_c8"] = make_linear(kg, 128, 32)
    p["da_pred"] = make_conv(kg, 32, nc[1], 1)
    p["ll_c8"] = make_linear(kg, 128, 32)
    p["ll_pred"] = make_conv(kg, 32, nc[2], 1)
    # detection branch
    p["obj1_c1"] = make_conv(kg, 2048, 2048, 3)
    p["obj1_c2"] = make_conv(kg, 2048, 1024, 1)
    p["obj_conv2"] = make_conv(kg, 1024, 512, 1)
    p["obj_conv3"] = make_conv(kg, 512, 256, 1)
    p["head"] = make_idetect(kg, nc[0], [256, 512, 1024])
    return p


# ----------------------------------------------------------------------------
# UNext forward (NHWC)
# ----------------------------------------------------------------------------
def unext_forward(p, x):
    # layer_1
    out = conv_fwd(p["l1_c1"], x, stride=1)
    out = conv_fwd(p["l1_c2"], out, stride=2)
    c1 = out
    # layer_2
    out = conv_fwd(p["l2_c1"], out, stride=1)
    out = conv_fwd(p["l2_c2"], out, stride=2)
    out = e_elan_fwd(p["l2_elan"], out)
    out = conv_fwd(p["l2_c3"], out, stride=1)
    c2 = out
    # layer_3
    out = mpconv_fwd(p["l3_mp"], out)
    out = e_elan_fwd(p["l3_elan"], out)
    out = conv_fwd(p["l3_c"], out, stride=1)
    c3 = out
    # layer_4
    out = mpconv_fwd(p["l4_mp"], out)
    out = e_elan_fwd(p["l4_elan"], out)
    out = conv_fwd(p["l4_c"], out, stride=1)
    c4 = out

    h4w4 = c4.shape[1:3]
    _c4 = mlp_fwd(p["linear_c4"], c4)
    _c3 = resize_bilinear(mlp_fwd(p["linear_c3"], c3), h4w4)
    _c2 = resize_bilinear(mlp_fwd(p["linear_c2"], c2), h4w4)
    _c1 = resize_bilinear(mlp_fwd(p["linear_c1"], c1), h4w4)
    _c = jnp.concatenate([_c4, _c3, _c2, _c1], axis=-1)
    _c = mlp_fwd(p["linear_c"], _c)

    c5 = jnp.concatenate([conv_fwd(p["linear_conv1"], _c),
                          conv_fwd(p["de4_conv"], c4)], axis=-1)
    c5 = resize_bilinear(mlp_fwd(p["linear_c5"], c5), c3.shape[1:3])
    c6 = jnp.concatenate([c5, conv_fwd(p["de3_conv"], c3)], axis=-1)
    c6 = resize_bilinear(mlp_fwd(p["linear_c6"], c6), c2.shape[1:3])
    out = jnp.concatenate([c6, conv_fwd(p["de2_conv"], c2)], axis=-1)

    # shared c7 / de1 launches for the two seg branches (cols 0:64=da, 64:128=ll)
    seg7 = resize_bilinear(mlp_fwd(p["seg_c7"], out), c1.shape[1:3])
    de1 = conv_fwd(p["seg_de1"], c1)
    da = jnp.concatenate([seg7[..., :64], de1[..., :64]], axis=-1)
    ll = jnp.concatenate([seg7[..., 64:], de1[..., 64:]], axis=-1)
    da = resize_bilinear(mlp_fwd(p["da_c8"], da), x.shape[1:3])
    ll = resize_bilinear(mlp_fwd(p["ll_c8"], ll), x.shape[1:3])

    d1 = conv_fwd(p["obj_conv3"], c3)
    d2 = conv_fwd(p["obj_conv2"], c4)
    d3 = conv_fwd(p["obj1_c2"], conv_fwd(p["obj1_c1"], _c, stride=2))
    deout = idetect_fwd(p["head"], [d1, d2, d3])

    da_pred = conv_fwd(p["da_pred"], da, out_dtype=jnp.float32)
    ll_pred = conv_fwd(p["ll_pred"], ll, out_dtype=jnp.float32)
    # return seg heads in NCHW like the PyTorch reference
    return deout, jnp.transpose(da_pred, (0, 3, 1, 2)), \
        jnp.transpose(ll_pred, (0, 3, 1, 2))


# TODO(synk): the PyTorch Model.__init__ stride probing / _initialize_biases /
# anchor re-ordering only mutate parameter values; weights here are synthetic,
# so that init-time logic is intentionally not replicated.

if __name__ == "__main__":
    nc = [13, 2, 2]          # [det classes, drivable-area classes, lane classes]
    params = build_params(nc, seed=0)

    key = jax.random.PRNGKey(0)
    x_nchw = jax.random.normal(key, (1, 3, 64, 64), jnp.float32)
    x = jnp.transpose(x_nchw, (0, 2, 3, 1))  # -> NHWC

    det, da_pred, ll_pred = unext_forward(params, x)
    det, da_pred, ll_pred = jax.block_until_ready((det, da_pred, ll_pred))

    # light sanity checks on output shapes
    assert det[0].shape == (1, 3, 8, 8, nc[0] + 5)
    assert det[1].shape == (1, 3, 4, 4, nc[0] + 5)
    assert det[2].shape == (1, 3, 2, 2, nc[0] + 5)
    assert da_pred.shape == (1, nc[1], 64, 64)
    assert ll_pred.shape == (1, nc[2], 64, 64)
    assert all(bool(jnp.all(jnp.isfinite(t))) for t in det)
    assert bool(jnp.all(jnp.isfinite(da_pred))) and bool(jnp.all(jnp.isfinite(ll_pred)))
    print("KERNEL_OK")
</pallas_src>

<mosaic_0001>
module attributes {stable_mosaic.version = 11 : i64} {
  func.func @_matmul_kernel(%arg0: i32, %arg1: i32, %arg2: i32, %arg3: memref<256x128xbf16, #tpu.memory_space<vmem>>, %arg4: memref<128x128xbf16, #tpu.memory_space<vmem>>, %arg5: memref<1x128xf32, #tpu.memory_space<vmem>>, %arg6: memref<256x128xbf16, #tpu.memory_space<vmem>>, %arg7: memref<256x128xf32, #tpu.memory_space<vmem>>) attributes {dimension_semantics = [#tpu.dimension_semantics<parallel>, #tpu.dimension_semantics<parallel>, #tpu.dimension_semantics<arbitrary>], iteration_bounds = array<i64: 16, 1, 1>, scalar_prefetch = 0 : i64, scratch_operands = 1 : i64, tpu.core_type = #tpu.core_type<tc>, window_params = [{transform_indices = @transform_0, window_bounds = array<i64: 256, 128>}, {transform_indices = @transform_1, window_bounds = array<i64: 128, 128>}, {transform_indices = @transform_2, window_bounds = array<i64: 1, 128>}, {transform_indices = @transform_3, window_bounds = array<i64: 256, 128>}]} {
    %c0_i32 = arith.constant 0 : i32
    %0 = arith.cmpi eq, %arg2, %c0_i32 : i32
    %1 = arith.extui %0 : i1 to i32
    %c0_i32_0 = arith.constant 0 : i32
    %2 = arith.cmpi ne, %1, %c0_i32_0 : i32
    scf.if %2 {
      %cst_10 = arith.constant 0.000000e+00 : f32
      %12 = vector.broadcast %cst_10 : f32 to vector<256x128xf32>
      %c0_11 = arith.constant 0 : index
      %c0_12 = arith.constant 0 : index
      %13 = vector.load %arg7[%c0_11, %c0_12] : memref<256x128xf32, #tpu.memory_space<vmem>>, vector<256x128xf32>
      tpu.vector_store %arg7[%c0_11, %c0_12], %12 {strides = array<i32>} : memref<256x128xf32, #tpu.memory_space<vmem>>, vector<256x128xf32>,
    } else {
    }
    %c0 = arith.constant 0 : index
    %c0_1 = arith.constant 0 : index
    %3 = vector.load %arg7[%c0, %c0_1] : memref<256x128xf32, #tpu.memory_space<vmem>>, vector<256x128xf32>
    %c0_2 = arith.constant 0 : index
    %c0_3 = arith.constant 0 : index
    %4 = vector.load %arg3[%c0_2, %c0_3] : memref<256x128xbf16, #tpu.memory_space<vmem>>, vector<256x128xbf16>
    %c0_4 = arith.constant 0 : index
    %c0_5 = arith.constant 0 : index
    %5 = vector.load %arg4[%c0_4, %c0_5] : memref<128x128xbf16, #tpu.memory_space<vmem>>, vector<128x128xbf16>
    %cst = arith.constant dense<0.000000e+00> : vector<256x128xf32>
    %6 = tpu.matmul %4, %5, %cst {dimension_numbers = #tpu.dot_dimension_numbers<[1], [0], [0], [1], [0, 0, 1, 1], [], []>} : vector<256x128xbf16>, vector<128x128xbf16>, vector<256x128xf32> -> vector<256x128xf32>
    %7 = arith.addf %3, %6 : vector<256x128xf32>
    %c0_6 = arith.constant 0 : index
    %c0_7 = arith.constant 0 : index
    %8 = vector.load %arg7[%c0_6, %c0_7] : memref<256x128xf32, #tpu.memory_space<vmem>>, vector<256x128xf32>
    tpu.vector_store %arg7[%c0_6, %c0_7], %7 {strides = array<i32>} : memref<256x128xf32, #tpu.memory_space<vmem>>, vector<256x128xf32>,
    %c0_i32_8 = arith.constant 0 : i32
    %9 = arith.cmpi eq, %arg2, %c0_i32_8 : i32
    %10 = arith.extui %9 : i1 to i32
    %c0_i32_9 = arith.constant 0 : i32
    %11 = arith.cmpi ne, %10, %c0_i32_9 : i32
    scf.if %11 {
      %c0_10 = arith.constant 0 : index
      %c0_11 = arith.constant 0 : index
      %12 = vector.load %arg7[%c0_10, %c0_11] : memref<256x128xf32, #tpu.memory_space<vmem>>, vector<256x128xf32>
      %c0_12 = arith.constant 0 : index
      %c0_13 = arith.constant 0 : index
      %13 = vector.load %arg5[%c0_12, %c0_13] : memref<1x128xf32, #tpu.memory_space<vmem>>, vector<1x128xf32>
      %14 = vector.broadcast %13 : vector<1x128xf32> to vector<256x128xf32>
      %15 = arith.addf %12, %14 : vector<256x128xf32>
      %cst_14 = arith.constant 0.000000e+00 : f32
      %16 = vector.broadcast %cst_14 : f32 to vector<256x128xf32>
      %17 = arith.subf %16, %15 : vector<256x128xf32>
      %18 = math.exp %17 : vector<256x128xf32>
      %cst_15 = arith.constant 1.000000e+00 : f32
      %19 = vector.broadcast %cst_15 : f32 to vector<256x128xf32>
      %20 = arith.addf %19, %18 : vector<256x128xf32>
      %21 = tpu.reciprocal %20 {approx = true} : vector<256x128xf32> -> vector<256x128xf32>
      %22 = arith.mulf %15, %21 : vector<256x128xf32>
      %23 = arith.truncf %22 : vector<256x128xf32> to vector<256x128xbf16>
      %c0_16 = arith.constant 0 : index
      %c0_17 = arith.constant 0 : index
      %24 = vector.load %arg6[%c0_16, %c0_17] : memref<256x128xbf16, #tpu.memory_space<vmem>>, vector<256x128xbf16>
      tpu.vector_store %arg6[%c0_16, %c0_17], %23 {strides = array<i32>} : memref<256x128xbf16, #tpu.memory_space<vmem>>, vector<256x128xbf16>,
    } else {
    }
    return
  }
  func.func @transform_0(%arg0: i32, %arg1: i32, %arg2: i32) -> (i32, i32) {
    %c0_i32 = arith.constant 0 : i32
    return %arg0, %arg2 : i32, i32
  }
  func.func @transform_1(%arg0: i32, %arg1: i32, %arg2: i32) -> (i32, i32) {
    %c0_i32 = arith.constant 0 : i32
    return %arg2, %arg1 : i32, i32
  }
  func.func @transform_2(%arg0: i32, %arg1: i32, %arg2: i32) -> (i32, i32) {
    %c0_i32 = arith.constant 0 : i32
    %c0_i32_0 = arith.constant 0 : i32
    return %c0_i32, %arg1 : i32, i32
  }
  func.func @transform_3(%arg0: i32, %arg1: i32, %arg2: i32) -> (i32, i32) {
    %c0_i32 = arith.constant 0 : i32
    return %arg0, %arg1 : i32, i32
  }
}

</mosaic_0001>

<llo_original>
// kernel: tpu_custom_call.1
$region0: #{tpu_custom_call.1}
  #allocation0 [shape = 'u32[]', space=smem, size = 0x4, offset = 0x4, fixed_abs, tag = 'smem constant byte address 0x4 - core index']
  #allocation1 [shape = 'u32[72,128]{1,0:T(1,128)}', space=vmem, size = 0x9000, scoped, tag = 'internal scratch']
  #allocation2 [shape = 'f32[256,128]{1,0:T(8,128)}', space=vmem, size = 0x20000, scoped, tag = 'scratch operand']
  %s0 = inlined_call_operand.hbm [shape: bf16[4096,128], index: 0, kind: input, shape index: {}]
  %s1 = inlined_call_operand.hbm [shape: bf16[128,128], index: 1, kind: input, shape index: {}]
  %s2 = inlined_call_operand.vmem [shape: f32[1,128], index: 2, kind: input, shape index: {}]
  %s3 = inlined_call_operand.hbm [shape: bf16[4096,128], index: 3, kind: output, shape index: {}]
  %s4 = sld [smem:[#allocation0]]
  $region61: #{tpu_custom_call.1} parent=0
    _
  %s6 = ssub.s32 1, %s4
  %s7 = scalar_select 0, %s6, %s4
  $region1: #{tpu_custom_call.1} parent=0
    #allocation3 [shape = 'u8[131072]{0}', space=vmem, size = 0x20000, scoped, tag = 'input window, operand 0']
    #allocation4 [shape = 's32[2]{0}', space=sflag, size = 0x8, scoped, tag = 'scoped memory for tpu_custom_call.1']
    #allocation5 [shape = 's32[2]{0}', space=sflag, size = 0x8, scoped, tag = 'scoped memory for tpu_custom_call.1']
    #allocation6 [shape = 'u8[32768]{0}', space=vmem, size = 0x8000, scoped, tag = 'input window, operand 1, single buffered']
    #allocation7 [shape = 's32[1]{0}', space=sflag, size = 0x4, scoped, tag = 'scoped memory for tpu_custom_call.1']
    #allocation8 [shape = 'u8[131072]{0}', space=vmem, size = 0x20000, scoped, tag = 'output window, operand 0']
    %8 = vsyncpa [#allocation4], 0
    %s9 = scalar_lea.sflag [#allocation4], 1
    %10 = vsyncpa %s9, 0
    %11 = vsyncpa [#allocation7], 0
    %12 = vsyncpa [#allocation5], 0
    %s13 = scalar_lea.sflag [#allocation5], 1
    %14 = vsyncpa %s13, 0
    loop: start=0, step=1, limit=18
    $region2: #{tpu_custom_call.1} parent=1 // loop_pre_header
      _
    $region3: #{tpu_custom_call.1} parent=1 // loop_header
      %s16 = sphi 0, %s20
      %p17 = scmp.ge.s32.totalorder %s16, 18
      %s23 = sphi 0, %s42
      %s24 = sphi 0, %s38
      %s25 = sphi 0, %s34
      %s26 = sphi 0, %s23
      %s27 = sphi 0, %s24
      %s28 = sphi 0, %s25
      %s29 = sphi 0, %s26
      %s30 = sphi 0, %s27
      %s31 = sphi 0, %s28
      %s47 = sphi 0, %s49
      %s50 = sphi 0, %s47
      %s51 = sphi 0, %s50
      %s67 = sphi 0, %s51
      %s75 = sphi 0, %s77
      %s78 = sphi 0, %s75
      %s79 = sphi 0, %s78
      %s95 = sphi 0, %s79
      %s101 = sphi 0, %s103
      %s104 = sphi 0, %s101
      %s105 = sphi 0, %s104
      %s121 = sphi 0, %s105
      %s129 = sphi 0, %s131
      %s132 = sphi 0, %s129
      %s133 = sphi 0, %s132
      %s149 = sphi 0, %s133
    $region4: #{tpu_custom_call.1} parent=1 // loop_header_branch
      %19 = sbr.rel (%p17) target = $region8
    $region5: #{tpu_custom_call.1} parent=1 // loop_body
      %s21 = ssub.s32 %s16, 1
      %s22 = ssub.s32 %s16, 2
      %s32 = sadd.s32 1, %s25
      %p33 = scmp.ge.s32.totalorder %s32, 1
      %s34 = scalar_select %p33, 0, %s32
      %s35 = sadd.s32 1, %s24
      %s36 = scalar_select %p33, %s35, %s24
      %p37 = scmp.ge.s32.totalorder %s36, 1
      %s38 = scalar_select %p37, 0, %s36
      %s39 = sadd.s32 1, %s23
      %s40 = scalar_select %p37, %s39, %s23
      %p41 = scmp.ge.s32.totalorder %s40, 16
      %s42 = scalar_select %p41, 0, %s40
      %s43 = ssub.s32 %s23, %s42
      %s44 = ssub.s32 %s25, %s34
      %s45 = sor.u32 %s43, %s44
      %p46 = scmp.eq.s32.totalorder %s45, 0
      %s48 = sadd.s32 %s47, 1
      %s49 = scalar_select %p46, %s47, %s48
      %p52 = pneg %p46
      %p53 = scmp.eq.s32.totalorder %s16, 15
      %p54 = por %p52, %p53
      %p55 = scmp.ne.s32.totalorder %s47, %s50
      %p56 = scmp.eq.s32.totalorder %s16, 0
      %p57 = por %p55, %p56
      %p58 = scmp.ne.s32.totalorder %s47, %s50
      %p59 = scmp.eq.s32.totalorder %s21, 15
      %p60 = por %p58, %p59
      %p61 = scmp.ne.s32.totalorder %s50, %s51
      %p62 = scmp.eq.s32.totalorder %s21, 0
      %p63 = por %p61, %p62
      %p64 = scmp.ne.s32.totalorder %s50, %s51
      %p65 = scmp.eq.s32.totalorder %s22, 15
      %p66 = por %p64, %p65
      %p68 = scmp.ne.s32.totalorder %s51, %s67
      %p69 = scmp.eq.s32.totalorder %s22, 0
      %p70 = por %p68, %p69
      %s71 = ssub.s32 %s25, %s34
      %s72 = ssub.s32 %s24, %s38
      %s73 = sor.u32 %s71, %s72
      %p74 = scmp.eq.s32.totalorder %s73, 0
      %s76 = sadd.s32 %s75, 1
      %s77 = scalar_select %p74, %s75, %s76
      %p80 = pneg %p74
      %p81 = scmp.eq.s32.totalorder %s16, 15
      %p82 = por %p80, %p81
      %p83 = scmp.ne.s32.totalorder %s75, %s78
      %p84 = scmp.eq.s32.totalorder %s16, 0
      %p85 = por %p83, %p84
      %p86 = scmp.ne.s32.totalorder %s75, %s78
      %p87 = scmp.eq.s32.totalorder %s21, 15
      %p88 = por %p86, %p87
      %p89 = scmp.ne.s32.totalorder %s78, %s79
      %p90 = scmp.eq.s32.totalorder %s21, 0
      %p91 = por %p89, %p90
      %p92 = scmp.ne.s32.totalorder %s78, %s79
      %p93 = scmp.eq.s32.totalorder %s22, 15
      %p94 = por %p92, %p93
      %p96 = scmp.ne.s32.totalorder %s79, %s95
      %p97 = scmp.eq.s32.totalorder %s22, 0
      %p98 = por %p96, %p97
      %s99 = ssub.s32 %s24, %s38
      %p100 = scmp.eq.s32.totalorder %s99, 0
      %s102 = sadd.s32 %s101, 1
      %s103 = scalar_select %p100, %s101, %s102
      %p106 = pneg %p100
      %p107 = scmp.eq.s32.totalorder %s16, 15
      %p108 = por %p106, %p107
      %p109 = scmp.ne.s32.totalorder %s101, %s104
      %p110 = scmp.eq.s32.totalorder %s16, 0
      %p111 = por %p109, %p110
      %p112 = scmp.ne.s32.totalorder %s101, %s104
      %p113 = scmp.eq.s32.totalorder %s21, 15
      %p114 = por %p112, %p113
      %p115 = scmp.ne.s32.totalorder %s104, %s105
      %p116 = scmp.eq.s32.totalorder %s21, 0
      %p117 = por %p115, %p116
      %p118 = scmp.ne.s32.totalorder %s104, %s105
      %p119 = scmp.eq.s32.totalorder %s22, 15
      %p120 = por %p118, %p119
      %p122 = scmp.ne.s32.totalorder %s105, %s121
      %p123 = scmp.eq.s32.totalorder %s22, 0
      %p124 = por %p122, %p123
      %s125 = ssub.s32 %s23, %s42
      %s126 = ssub.s32 %s24, %s38
      %s127 = sor.u32 %s125, %s126
      %p128 = scmp.eq.s32.totalorder %s127, 0
      %s130 = sadd.s32 %s129, 1
      %s131 = scalar_select %p128, %s129, %s130
      %p134 = pneg %p128
      %p135 = scmp.eq.s32.totalorder %s16, 15
      %p136 = por %p134, %p135
      %p137 = scmp.ne.s32.totalorder %s129, %s132
      %p138 = scmp.eq.s32.totalorder %s16, 0
      %p139 = por %p137, %p138
      %p140 = scmp.ne.s32.totalorder %s129, %s132
      %p141 = scmp.eq.s32.totalorder %s21, 15
      %p142 = por %p140, %p141
      %p143 = scmp.ne.s32.totalorder %s132, %s133
      %p144 = scmp.eq.s32.totalorder %s21, 0
      %p145 = por %p143, %p144
      %p146 = scmp.ne.s32.totalorder %s132, %s133
      %p147 = scmp.eq.s32.totalorder %s22, 15
      %p148 = por %p146, %p147
      %p150 = scmp.ne.s32.totalorder %s133, %s149
      %p151 = scmp.eq.s32.totalorder %s22, 0
      %p152 = por %p150, %p151
      %p153 = scmp.le.s32.totalorder 1, %s16
      %p154 = scmp.lt.s32.totalorder %s16, 17
      %p155 = pnand %p153, %p154
      %p156 = pneg %p155
      // Predicated region
      $region9: #{tpu_custom_call.1} parent=5 // pred_check
        _
      $region10: #{tpu_custom_call.1} parent=5 // pred_check_branch
        %158 = sbr.rel (%p155) target = $region12
      $region11: #{tpu_custom_call.1} parent=5 // pred_region
        %s159 = ssub.s32 %s16, 1
        // Predicated region
        $region13: #{tpu_custom_call.1} parent=11 // pred_check
          %p160 = pneg %p91
        $region14: #{tpu_custom_call.1} parent=11 // pred_check_branch
          %162 = sbr.rel (%p160) target = $region16
        $region15: #{tpu_custom_call.1} parent=11 // pred_region
          %s163 = smul.u32 16, %s28
          %165 = vsyncadd [#allocation7], 0
          %s166 = sadd.s32 %s27, %s163
          %s167 = smul.addr %s166, 4
          %s168 = scalar_lea.hbm %s1, %s167
          %s169 = sshll.u32 %s168, 4
          %s170 = int_to_ptr.hbm [resolvable:$true] %s169
          %s171 = sshll.u32 [#allocation6], 4
          %s172 = int_to_ptr.vmem [resolvable:$true] %s171
          %177 = dma.hbm_to_vmem [thread:$0]  %s170, 1024, %s172, [#allocation7], 64, 64, 4
        $region16: #{tpu_custom_call.1} parent=11 // pred_fallthru
          _
        // Predicated region
        $region17: #{tpu_custom_call.1} parent=11 // pred_check
          %p178 = pneg %p117
        $region18: #{tpu_custom_call.1} parent=11 // pred_check_branch
          %180 = sbr.rel (%p178) target = $region20
        $region19: #{tpu_custom_call.1} parent=11 // pred_region
          %p181 = scmp.lt.s32.totalorder %s27, 0
          %s182 = scalar_select %p181, %s27, 0
          %s183 = scalar_lea.vmem %s2, %s182
        $region20: #{tpu_custom_call.1} parent=11 // pred_fallthru
          _
      $region12: #{tpu_custom_call.1} parent=5 // pred_fallthru
        _
      %p184 = scmp.lt.s32.totalorder %s16, 16
      // Predicated region
      $region21: #{tpu_custom_call.1} parent=5 // pred_check
        %p185 = pneg %p184
      $region22: #{tpu_custom_call.1} parent=5 // pred_check_branch
        %187 = sbr.rel (%p185) target = $region24
      $region23: #{tpu_custom_call.1} parent=5 // pred_region
        // Predicated region
        $region25: #{tpu_custom_call.1} parent=23 // pred_check
          %p188 = pneg %p57
        $region26: #{tpu_custom_call.1} parent=23 // pred_check_branch
          %190 = sbr.rel (%p188) target = $region28
        $region27: #{tpu_custom_call.1} parent=23 // pred_region
          %s191 = sand.u32 %s47, 1
          %s192 = scalar_lea.sflag [#allocation4], %s191
          %s193 = sand.u32 %s47, 1
          %s194 = smul.addr %s193, 128
          %s195 = scalar_lea.vmem [#allocation3], %s194
          %s196 = smul.u32 32, %s23
          %198 = vsyncadd %s192, 0
          %s199 = sadd.s32 %s25, %s196
          %s200 = smul.addr %s199, 4
          %s201 = scalar_lea.hbm %s0, %s200
          %s202 = sshll.u32 %s201, 4
          %s203 = int_to_ptr.hbm [resolvable:$true] %s202
          %s204 = sshll.u32 %s195, 4
          %s205 = int_to_ptr.vmem [resolvable:$true] %s204
          %210 = dma.hbm_to_vmem [thread:$0]  %s203, 2048, %s205, %s192, 64, 64, 4
        $region28: #{tpu_custom_call.1} parent=23 // pred_fallthru
          _
      $region24: #{tpu_custom_call.1} parent=5 // pred_fallthru
        _
      %p211 = scmp.le.s32.totalorder 1, %s16
      %p212 = scmp.lt.s32.totalorder %s16, 17
      %p213 = pnand %p211, %p212
      %p214 = pneg %p213
      // Predicated region
      $region29: #{tpu_custom_call.1} parent=5 // pred_check
        _
      $region30: #{tpu_custom_call.1} parent=5 // pred_check_branch
        %216 = sbr.rel (%p213) target = $region32
      $region31: #{tpu_custom_call.1} parent=5 // pred_region
        %s217 = ssub.s32 %s16, 1
        %s218 = sand.u32 %s50, 1
        %s219 = scalar_lea.sflag [#allocation4], %s218
        %s220 = sand.u32 %s50, 1
        %s221 = smul.addr %s220, 128
        %s222 = scalar_lea.vmem [#allocation3], %s221
        // Predicated region
        $region33: #{tpu_custom_call.1} parent=31 // pred_check
          %p223 = pneg %p63
        $region34: #{tpu_custom_call.1} parent=31 // pred_check_branch
          %225 = sbr.rel (%p223) target = $region36
        $region35: #{tpu_custom_call.1} parent=31 // pred_region
          %227 = dma.done %s219, 2048
        $region36: #{tpu_custom_call.1} parent=31 // pred_fallthru
          _
        // Predicated region
        $region37: #{tpu_custom_call.1} parent=31 // pred_check
          %p228 = pneg %p91
        $region38: #{tpu_custom_call.1} parent=31 // pred_check_branch
          %230 = sbr.rel (%p228) target = $region40
        $region39: #{tpu_custom_call.1} parent=31 // pred_region
          %232 = dma.done [#allocation7], 1024
        $region40: #{tpu_custom_call.1} parent=31 // pred_fallthru
          _
        %s233 = sand.u32 %s50, 1
        %s234 = scalar_lea.sflag [#allocation4], %s233
        %s235 = sand.u32 %s50, 1
        %s236 = smul.addr %s235, 128
        %s237 = scalar_lea.vmem [#allocation3], %s236
        %p238 = pneg %p63
        %p239 = pneg %p60
        %p240 = pneg %p91
        %p241 = pneg %p88
        %p242 = scmp.lt.s32.totalorder %s27, 0
        %s243 = scalar_select %p242, %s27, 0
        %s244 = scalar_lea.vmem %s2, %s243
        %p245 = pneg %p117
        %p246 = pneg %p114
        %p247 = pneg %p145
        %p248 = pneg %p142
        %s249 = sand.u32 %s132, 1
        %s250 = scalar_lea.sflag [#allocation5], %s249
        %s251 = sand.u32 %s132, 1
        %s252 = smul.addr %s251, 128
        %s253 = scalar_lea.vmem [#allocation8], %s252
        %s254 = smul.u32 32, %s26
        %s255 = smul.u32 16, %s28
        %p256 = scmp.lt.s32.totalorder %s27, 0
        %s257 = scalar_select %p256, %s27, 0
        %s258 = scalar_lea.vmem %s2, %s257
        %s259 = smul.u32 32, %s26
        %p260 = scmp.eq.s32.totalorder %s28, 0
        // Predicated region
        $region41: #{tpu_custom_call.1} parent=31 // pred_check
          %p261 = pneg %p260
        $region42: #{tpu_custom_call.1} parent=31 // pred_check_branch
          %263 = sbr.rel (%p261) target = $region44
        $region43: #{tpu_custom_call.1} parent=31 // pred_region
          %264 = vst [vmem:[#allocation2] sm:$0xff] 0.0
          %265 = vst [vmem:[#allocation2 + $0x8] sm:$0xff] 0.0
          %266 = vst [vmem:[#allocation2 + $0x10] sm:$0xff] 0.0
          %267 = vst [vmem:[#allocation2 + $0x18] sm:$0xff] 0.0
          %268 = vst [vmem:[#allocation2 + $0x20] sm:$0xff] 0.0
          %269 = vst [vmem:[#allocation2 + $0x28] sm:$0xff] 0.0
          %270 = vst [vmem:[#allocation2 + $0x30] sm:$0xff] 0.0
          %271 = vst [vmem:[#allocation2 + $0x38] sm:$0xff] 0.0
          %272 = vst [vmem:[#allocation2 + $0x40] sm:$0xff] 0.0
          %273 = vst [vmem:[#allocation2 + $0x48] sm:$0xff] 0.0
          %274 = vst [vmem:[#allocation2 + $0x50] sm:$0xff] 0.0
          %275 = vst [vmem:[#allocation2 + $0x58] sm:$0xff] 0.0
          %276 = vst [vmem:[#allocation2 + $0x60] sm:$0xff] 0.0
          %277 = vst [vmem:[#allocation2 + $0x68] sm:$0xff] 0.0
          %278 = vst [vmem:[#allocation2 + $0x70] sm:$0xff] 0.0
          %279 = vst [vmem:[#allocation2 + $0x78] sm:$0xff] 0.0
          %280 = vst [vmem:[#allocation2 + $0x80] sm:$0xff] 0.0
          %281 = vst [vmem:[#allocation2 + $0x88] sm:$0xff] 0.0
          %282 = vst [vmem:[#allocation2 + $0x90] sm:$0xff] 0.0
          %283 = vst [vmem:[#allocation2 + $0x98] sm:$0xff] 0.0
          %284 = vst [vmem:[#allocation2 + $0xa0] sm:$0xff] 0.0
          %285 = vst [vmem:[#allocation2 + $0xa8] sm:$0xff] 0.0
          %286 = vst [vmem:[#allocation2 + $0xb0] sm:$0xff] 0.0
          %287 = vst [vmem:[#allocation2 + $0xb8] sm:$0xff] 0.0
          %288 = vst [vmem:[#allocation2 + $0xc0] sm:$0xff] 0.0
          %289 = vst [vmem:[#allocation2 + $0xc8] sm:$0xff] 0.0
          %290 = vst [vmem:[#allocation2 + $0xd0] sm:$0xff] 0.0
          %291 = vst [vmem:[#allocation2 + $0xd8] sm:$0xff] 0.0
          %292 = vst [vmem:[#allocation2 + $0xe0] sm:$0xff] 0.0
          %293 = vst [vmem:[#allocation2 + $0xe8] sm:$0xff] 0.0
          %294 = vst [vmem:[#allocation2 + $0xf0] sm:$0xff] 0.0
          %295 = vst [vmem:[#allocation2 + $0xf8] sm:$0xff] 0.0
        $region44: #{tpu_custom_call.1} parent=31 // pred_fallthru
          _
        %v296 = vld [vmem:[#allocation2] sm:$0xff]
        %v297 = vld [vmem:[#allocation2 + $0x8] sm:$0xff]
        %v298 = vld [vmem:[#allocation2 + $0x10] sm:$0xff]
        %v299 = vld [vmem:[#allocation2 + $0x18] sm:$0xff]
        %v300 = vld [vmem:[#allocation2 + $0x20] sm:$0xff]
        %v301 = vld [vmem:[#allocation2 + $0x28] sm:$0xff]
        %v302 = vld [vmem:[#allocation2 + $0x30] sm:$0xff]
        %v303 = vld [vmem:[#allocation2 + $0x38] sm:$0xff]
        %v304 = vld [vmem:[#allocation2 + $0x40] sm:$0xff]
        %v305 = vld [vmem:[#allocation2 + $0x48] sm:$0xff]
        %v306 = vld [vmem:[#allocation2 + $0x50] sm:$0xff]
        %v307 = vld [vmem:[#allocation2 + $0x58] sm:$0xff]
        %v308 = vld [vmem:[#allocation2 + $0x60] sm:$0xff]
        %v309 = vld [vmem:[#allocation2 + $0x68] sm:$0xff]
        %v310 = vld [vmem:[#allocation2 + $0x70] sm:$0xff]
        %v311 = vld [vmem:[#allocation2 + $0x78] sm:$0xff]
        %v312 = vld [vmem:[#allocation2 + $0x80] sm:$0xff]
        %v313 = vld [vmem:[#allocation2 + $0x88] sm:$0xff]
        %v314 = vld [vmem:[#allocation2 + $0x90] sm:$0xff]
        %v315 = vld [vmem:[#allocation2 + $0x98] sm:$0xff]
        %v316 = vld [vmem:[#allocation2 + $0xa0] sm:$0xff]
        %v317 = vld [vmem:[#allocation2 + $0xa8] sm:$0xff]
        %v318 = vld [vmem:[#allocation2 + $0xb0] sm:$0xff]
        %v319 = vld [vmem:[#allocation2 + $0xb8] sm:$0xff]
        %v320 = vld [vmem:[#allocation2 + $0xc0] sm:$0xff]
        %v321 = vld [vmem:[#allocation2 + $0xc8] sm:$0xff]
        %v322 = vld [vmem:[#allocation2 + $0xd0] sm:$0xff]
        %v323 = vld [vmem:[#allocation2 + $0xd8] sm:$0xff]
        %v324 = vld [vmem:[#allocation2 + $0xe0] sm:$0xff]
        %v325 = vld [vmem:[#allocation2 + $0xe8] sm:$0xff]
        %v326 = vld [vmem:[#allocation2 + $0xf0] sm:$0xff]
        %v327 = vld [vmem:[#allocation2 + $0xf8] sm:$0xff]
        %v328 = vld [vmem:[%s222] sm:$0xf]
        %v329 = vld [vmem:[%s222 + $0x4] sm:$0xf]
        %v330 = vld [vmem:[%s222 + $0x8] sm:$0xf]
        %v331 = vld [vmem:[%s222 + $0xc] sm:$0xf]
        %v332 = vld [vmem:[%s222 + $0x10] sm:$0xf]
        %v333 = vld [vmem:[%s222 + $0x14] sm:$0xf]
        %v334 = vld [vmem:[%s222 + $0x18] sm:$0xf]
        %v335 = vld [vmem:[%s222 + $0x1c] sm:$0xf]
        %v336 = vld [vmem:[%s222 + $0x20] sm:$0xf]
        %v337 = vld [vmem:[%s222 + $0x24] sm:$0xf]
        %v338 = vld [vmem:[%s222 + $0x28] sm:$0xf]
        %v339 = vld [vmem:[%s222 + $0x2c] sm:$0xf]
        %v340 = vld [vmem:[%s222 + $0x30] sm:$0xf]
        %v341 = vld [vmem:[%s222 + $0x34] sm:$0xf]
        %v342 = vld [vmem:[%s222 + $0x38] sm:$0xf]
        %v343 = vld [vmem:[%s222 + $0x3c] sm:$0xf]
        %v344 = vld [vmem:[%s222 + $0x40] sm:$0xf]
        %v345 = vld [vmem:[%s222 + $0x44] sm:$0xf]
        %v346 = vld [vmem:[%s222 + $0x48] sm:$0xf]
        %v347 = vld [vmem:[%s222 + $0x4c] sm:$0xf]
        %v348 = vld [vmem:[%s222 + $0x50] sm:$0xf]
        %v349 = vld [vmem:[%s222 + $0x54] sm:$0xf]
        %v350 = vld [vmem:[%s222 + $0x58] sm:$0xf]
        %v351 = vld [vmem:[%s222 + $0x5c] sm:$0xf]
        %v352 = vld [vmem:[%s222 + $0x60] sm:$0xf]
        %v353 = vld [vmem:[%s222 + $0x64] sm:$0xf]
        %v354 = vld [vmem:[%s222 + $0x68] sm:$0xf]
        %v355 = vld [vmem:[%s222 + $0x6c] sm:$0xf]
        %v356 = vld [vmem:[%s222 + $0x70] sm:$0xf]
        %v357 = vld [vmem:[%s222 + $0x74] sm:$0xf]
        %v358 = vld [vmem:[%s222 + $0x78] sm:$0xf]
        %v359 = vld [vmem:[%s222 + $0x7c] sm:$0xf]
        %v360 = vld [vmem:[#allocation6] sm:$0xf]
        %v361 = vld [vmem:[#allocation6 + $0x4] sm:$0xf]
        %v362 = vld [vmem:[#allocation6 + $0x8] sm:$0xf]
        %v363 = vld [vmem:[#allocation6 + $0xc] sm:$0xf]
        %v364 = vld [vmem:[#allocation6 + $0x10] sm:$0xf]
        %v365 = vld [vmem:[#allocation6 + $0x14] sm:$0xf]
        %v366 = vld [vmem:[#allocation6 + $0x18] sm:$0xf]
        %v367 = vld [vmem:[#allocation6 + $0x1c] sm:$0xf]
        %v368 = vld [vmem:[#allocation6 + $0x20] sm:$0xf]
        %v369 = vld [vmem:[#allocation6 + $0x24] sm:$0xf]
        %v370 = vld [vmem:[#allocation6 + $0x28] sm:$0xf]
        %v371 = vld [vmem:[#allocation6 + $0x2c] sm:$0xf]
        %v372 = vld [vmem:[#allocation6 + $0x30] sm:$0xf]
        %v373 = vld [vmem:[#allocation6 + $0x34] sm:$0xf]
        %v374 = vld [vmem:[#allocation6 + $0x38] sm:$0xf]
        %v375 = vld [vmem:[#allocation6 + $0x3c] sm:$0xf]
        %v408 = vunpack.c.l.b16 %v328
        %v409 = vunpack.c.l.b16 %v329
        %v410 = vunpack.c.l.b16 %v330
        %v411 = vunpack.c.l.b16 %v331
        %v412 = vunpack.c.l.b16 %v332
        %v413 = vunpack.c.l.b16 %v333
        %v414 = vunpack.c.l.b16 %v334
        %v415 = vunpack.c.l.b16 %v335
        %v416 = vunpack.c.l.b16 %v336
        %v417 = vunpack.c.l.b16 %v337
        %v418 = vunpack.c.l.b16 %v338
        %v419 = vunpack.c.l.b16 %v339
        %v420 = vunpack.c.l.b16 %v340
        %v421 = vunpack.c.l.b16 %v341
        %v422 = vunpack.c.l.b16 %v342
        %v423 = vunpack.c.l.b16 %v343
        %v424 = vunpack.c.l.b16 %v344
        %v425 = vunpack.c.l.b16 %v345
        %v426 = vunpack.c.l.b16 %v346
        %v427 = vunpack.c.l.b16 %v347
        %v428 = vunpack.c.l.b16 %v348
        %v429 = vunpack.c.l.b16 %v349
        %v430 = vunpack.c.l.b16 %v350
        %v431 = vunpack.c.l.b16 %v351
        %v432 = vunpack.c.l.b16 %v352
        %v433 = vunpack.c.l.b16 %v353
        %v434 = vunpack.c.l.b16 %v354
        %v435 = vunpack.c.l.b16 %v355
        %v436 = vunpack.c.l.b16 %v356
        %v437 = vunpack.c.l.b16 %v357
        %v438 = vunpack.c.l.b16 %v358
        %v439 = vunpack.c.l.b16 %v359
        %v440 = vpack.c.b16 %v409, %v408
        %v441 = vpack.c.b16 %v411, %v410
        %v442 = vpack.c.b16 %v413, %v412
        %v443 = vpack.c.b16 %v415, %v414
        %v444 = vpack.c.b16 %v417, %v416
        %v445 = vpack.c.b16 %v419, %v418
        %v446 = vpack.c.b16 %v421, %v420
        %v447 = vpack.c.b16 %v423, %v422
        %v448 = vpack.c.b16 %v425, %v424
        %v449 = vpack.c.b16 %v427, %v426
        %v450 = vpack.c.b16 %v429, %v428
        %v451 = vpack.c.b16 %v431, %v430
        %v452 = vpack.c.b16 %v433, %v432
        %v453 = vpack.c.b16 %v435, %v434
        %v454 = vpack.c.b16 %v437, %v436
        %v455 = vpack.c.b16 %v439, %v438
        %v488 = vunpack.c.l.b16 %v360
        %v489 = vunpack.c.l.b16 %v361
        %v490 = vunpack.c.l.b16 %v362
        %v491 = vunpack.c.l.b16 %v363
        %v492 = vunpack.c.l.b16 %v364
        %v493 = vunpack.c.l.b16 %v365
        %v494 = vunpack.c.l.b16 %v366
        %v495 = vunpack.c.l.b16 %v367
        %v496 = vunpack.c.l.b16 %v368
        %v497 = vunpack.c.l.b16 %v369
        %v498 = vunpack.c.l.b16 %v370
        %v499 = vunpack.c.l.b16 %v371
        %v500 = vunpack.c.l.b16 %v372
        %v501 = vunpack.c.l.b16 %v373
        %v502 = vunpack.c.l.b16 %v374
        %v503 = vunpack.c.l.b16 %v375
        %v504 = vpack.c.b16 %v489, %v488
        %v505 = vpack.c.b16 %v491, %v490
        %v506 = vpack.c.b16 %v493, %v492
        %v507 = vpack.c.b16 %v495, %v494
        %v508 = vpack.c.b16 %v497, %v496
        %v509 = vpack.c.b16 %v499, %v498
        %v510 = vpack.c.b16 %v501, %v500
        %v511 = vpack.c.b16 %v503, %v502
        %520 = vmatpush.bf16.msra.mxu0 %v511
        %521 = vmatpush.bf16.msra.mxu0 %v510
        %522 = vmatpush.bf16.msra.mxu0 %v509
        %523 = vmatpush.bf16.msra.mxu0 %v508
        %524 = vmatpush.bf16.msra.mxu0 %v507
        %525 = vmatpush.bf16.msra.mxu0 %v506
        %526 = vmatpush.bf16.msra.mxu0 %v505
        %527 = vmatpush.bf16.msra.mxu0 %v504
        %528 = vmatmul.bf16.gmra.mxu0 %v440
        %v529 = vpop.f32.mrf.mxu0
        %v530 = vadd.f32 0.0, %v529
        %v531 = vpop.f32.mrf.mxu0
        %v532 = vadd.f32 0.0, %v531
        %533 = vmatmul.bf16.gmra.mxu0 %v441
        %v534 = vpop.f32.mrf.mxu0
        %v535 = vadd.f32 0.0, %v534
        %v536 = vpop.f32.mrf.mxu0
        %v537 = vadd.f32 0.0, %v536
        %538 = vmatmul.bf16.gmra.mxu0 %v442
        %v539 = vpop.f32.mrf.mxu0
        %v540 = vadd.f32 0.0, %v539
        %v541 = vpop.f32.mrf.mxu0
        %v542 = vadd.f32 0.0, %v541
        %543 = vmatmul.bf16.gmra.mxu0 %v443
        %v544 = vpop.f32.mrf.mxu0
        %v545 = vadd.f32 0.0, %v544
        %v546 = vpop.f32.mrf.mxu0
        %v547 = vadd.f32 0.0, %v546
        %548 = vmatmul.bf16.gmra.mxu0 %v444
        %v549 = vpop.f32.mrf.mxu0
        %v550 = vadd.f32 0.0, %v549
        %v551 = vpop.f32.mrf.mxu0
        %v552 = vadd.f32 0.0, %v551
        %553 = vmatmul.bf16.gmra.mxu0 %v445
        %v554 = vpop.f32.mrf.mxu0
        %v555 = vadd.f32 0.0, %v554
        %v556 = vpop.f32.mrf.mxu0
        %v557 = vadd.f32 0.0, %v556
        %558 = vmatmul.bf16.gmra.mxu0 %v446
        %v559 = vpop.f32.mrf.mxu0
        %v560 = vadd.f32 0.0, %v559
        %v561 = vpop.f32.mrf.mxu0
        %v562 = vadd.f32 0.0, %v561
        %563 = vmatmul.bf16.gmra.mxu0 %v447
        %v564 = vpop.f32.mrf.mxu0
        %v565 = vadd.f32 0.0, %v564
        %v566 = vpop.f32.mrf.mxu0
        %v567 = vadd.f32 0.0, %v566
        %568 = vmatmul.bf16.gmra.mxu0 %v448
        %v569 = vpop.f32.mrf.mxu0
        %v570 = vadd.f32 0.0, %v569
        %v571 = vpop.f32.mrf.mxu0
        %v572 = vadd.f32 0.0, %v571
        %573 = vmatmul.bf16.gmra.mxu0 %v449
        %v574 = vpop.f32.mrf.mxu0
        %v575 = vadd.f32 0.0, %v574
        %v576 = vpop.f32.mrf.mxu0
        %v577 = vadd.f32 0.0, %v576
        %578 = vmatmul.bf16.gmra.mxu0 %v450
        %v579 = vpop.f32.mrf.mxu0
        %v580 = vadd.f32 0.0, %v579
        %v581 = vpop.f32.mrf.mxu0
        %v582 = vadd.f32 0.0, %v581
        %583 = vmatmul.bf16.gmra.mxu0 %v451
        %v584 = vpop.f32.mrf.mxu0
        %v585 = vadd.f32 0.0, %v584
        %v586 = vpop.f32.mrf.mxu0
        %v587 = vadd.f32 0.0, %v586
        %588 = vmatmul.bf16.gmra.mxu0 %v452
        %v589 = vpop.f32.mrf.mxu0
        %v590 = vadd.f32 0.0, %v589
        %v591 = vpop.f32.mrf.mxu0
        %v592 = vadd.f32 0.0, %v591
        %593 = vmatmul.bf16.gmra.mxu0 %v453
        %v594 = vpop.f32.mrf.mxu0
        %v595 = vadd.f32 0.0, %v594
        %v596 = vpop.f32.mrf.mxu0
        %v597 = vadd.f32 0.0, %v596
        %598 = vmatmul.bf16.gmra.mxu0 %v454
        %v599 = vpop.f32.mrf.mxu0
        %v600 = vadd.f32 0.0, %v599
        %v601 = vpop.f32.mrf.mxu0
        %v602 = vadd.f32 0.0, %v601
        %603 = vmatmul.bf16.gmra.mxu0 %v455
        %v604 = vpop.f32.mrf.mxu0
        %v605 = vadd.f32 0.0, %v604
        %v606 = vpop.f32.mrf.mxu0
        %v607 = vadd.f32 0.0, %v606
        %608 = vdwg.mxu0
        %v609 = vadd.f32 %v296, %v530
        %v610 = vadd.f32 %v297, %v532
        %v611 = vadd.f32 %v298, %v535
        %v612 = vadd.f32 %v299, %v537
        %v613 = vadd.f32 %v300, %v540
        %v614 = vadd.f32 %v301, %v542
        %v615 = vadd.f32 %v302, %v545
        %v616 = vadd.f32 %v303, %v547
        %v617 = vadd.f32 %v304, %v550
        %v618 = vadd.f32 %v305, %v552
        %v619 = vadd.f32 %v306, %v555
        %v620 = vadd.f32 %v307, %v557
        %v621 = vadd.f32 %v308, %v560
        %v622 = vadd.f32 %v309, %v562
        %v623 = vadd.f32 %v310, %v565
        %v624 = vadd.f32 %v311, %v567
        %v625 = vadd.f32 %v312, %v570
        %v626 = vadd.f32 %v313, %v572
        %v627 = vadd.f32 %v314, %v575
        %v628 = vadd.f32 %v315, %v577
        %v629 = vadd.f32 %v316, %v580
        %v630 = vadd.f32 %v317, %v582
        %v631 = vadd.f32 %v318, %v585
        %v632 = vadd.f32 %v319, %v587
        %v633 = vadd.f32 %v320, %v590
        %v634 = vadd.f32 %v321, %v592
        %v635 = vadd.f32 %v322, %v595
        %v636 = vadd.f32 %v323, %v597
        %v637 = vadd.f32 %v324, %v600
        %v638 = vadd.f32 %v325, %v602
        %v639 = vadd.f32 %v326, %v605
        %v640 = vadd.f32 %v327, %v607
        %641 = vst [vmem:[#allocation2] sm:$0xff] %v609
        %642 = vst [vmem:[#allocation2 + $0x8] sm:$0xff] %v610
        %643 = vst [vmem:[#allocation2 + $0x10] sm:$0xff] %v611
        %644 = vst [vmem:[#allocation2 + $0x18] sm:$0xff] %v612
        %645 = vst [vmem:[#allocation2 + $0x20] sm:$0xff] %v613
        %646 = vst [vmem:[#allocation2 + $0x28] sm:$0xff] %v614
        %647 = vst [vmem:[#allocation2 + $0x30] sm:$0xff] %v615
        %648 = vst [vmem:[#allocation2 + $0x38] sm:$0xff] %v616
        %649 = vst [vmem:[#allocation2 + $0x40] sm:$0xff] %v617
        %650 = vst [vmem:[#allocation2 + $0x48] sm:$0xff] %v618
        %651 = vst [vmem:[#allocation2 + $0x50] sm:$0xff] %v619
        %652 = vst [vmem:[#allocation2 + $0x58] sm:$0xff] %v620
        %653 = vst [vmem:[#allocation2 + $0x60] sm:$0xff] %v621
        %654 = vst [vmem:[#allocation2 + $0x68] sm:$0xff] %v622
        %655 = vst [vmem:[#allocation2 + $0x70] sm:$0xff] %v623
        %656 = vst [vmem:[#allocation2 + $0x78] sm:$0xff] %v624
        %657 = vst [vmem:[#allocation2 + $0x80] sm:$0xff] %v625
        %658 = vst [vmem:[#allocation2 + $0x88] sm:$0xff] %v626
        %659 = vst [vmem:[#allocation2 + $0x90] sm:$0xff] %v627
        %660 = vst [vmem:[#allocation2 + $0x98] sm:$0xff] %v628
        %661 = vst [vmem:[#allocation2 + $0xa0] sm:$0xff] %v629
        %662 = vst [vmem:[#allocation2 + $0xa8] sm:$0xff] %v630
        %663 = vst [vmem:[#allocation2 + $0xb0] sm:$0xff] %v631
        %664 = vst [vmem:[#allocation2 + $0xb8] sm:$0xff] %v632
        %665 = vst [vmem:[#allocation2 + $0xc0] sm:$0xff] %v633
        %666 = vst [vmem:[#allocation2 + $0xc8] sm:$0xff] %v634
        %667 = vst [vmem:[#allocation2 + $0xd0] sm:$0xff] %v635
        %668 = vst [vmem:[#allocation2 + $0xd8] sm:$0xff] %v636
        %669 = vst [vmem:[#allocation2 + $0xe0] sm:$0xff] %v637
        %670 = vst [vmem:[#allocation2 + $0xe8] sm:$0xff] %v638
        %671 = vst [vmem:[#allocation2 + $0xf0] sm:$0xff] %v639
        %672 = vst [vmem:[#allocation2 + $0xf8] sm:$0xff] %v640
        // Predicated region
        $region45: #{tpu_custom_call.1} parent=31 // pred_check
          %p673 = pneg %p260
        $region46: #{tpu_custom_call.1} parent=31 // pred_check_branch
          %675 = sbr.rel (%p673) target = $region48
        $region47: #{tpu_custom_call.1} parent=31 // pred_region
          %v676 = vld [vmem:[#allocation2] sm:$0xff]
          %v677 = vld [vmem:[#allocation2 + $0x8] sm:$0xff]
          %v678 = vld [vmem:[#allocation2 + $0x10] sm:$0xff]
          %v679 = vld [vmem:[#allocation2 + $0x18] sm:$0xff]
          %v680 = vld [vmem:[#allocation2 + $0x20] sm:$0xff]
          %v681 = vld [vmem:[#allocation2 + $0x28] sm:$0xff]
          %v682 = vld [vmem:[#allocation2 + $0x30] sm:$0xff]
          %v683 = vld [vmem:[#allocation2 + $0x38] sm:$0xff]
          %v684 = vld [vmem:[#allocation2 + $0x40] sm:$0xff]
          %v685 = vld [vmem:[#allocation2 + $0x48] sm:$0xff]
          %v686 = vld [vmem:[#allocation2 + $0x50] sm:$0xff]
          %v687 = vld [vmem:[#allocation2 + $0x58] sm:$0xff]
          %v688 = vld [vmem:[#allocation2 + $0x60] sm:$0xff]
          %v689 = vld [vmem:[#allocation2 + $0x68] sm:$0xff]
          %v690 = vld [vmem:[#allocation2 + $0x70] sm:$0xff]
          %v691 = vld [vmem:[#allocation2 + $0x78] sm:$0xff]
          %v692 = vld [vmem:[#allocation2 + $0x80] sm:$0xff]
          %v693 = vld [vmem:[#allocation2 + $0x88] sm:$0xff]
          %v694 = vld [vmem:[#allocation2 + $0x90] sm:$0xff]
          %v695 = vld [vmem:[#allocation2 + $0x98] sm:$0xff]
          %v696 = vld [vmem:[#allocation2 + $0xa0] sm:$0xff]
          %v697 = vld [vmem:[#allocation2 + $0xa8] sm:$0xff]
          %v698 = vld [vmem:[#allocation2 + $0xb0] sm:$0xff]
          %v699 = vld [vmem:[#allocation2 + $0xb8] sm:$0xff]
          %v700 = vld [vmem:[#allocation2 + $0xc0] sm:$0xff]
          %v701 = vld [vmem:[#allocation2 + $0xc8] sm:$0xff]
          %v702 = vld [vmem:[#allocation2 + $0xd0] sm:$0xff]
          %v703 = vld [vmem:[#allocation2 + $0xd8] sm:$0xff]
          %v704 = vld [vmem:[#allocation2 + $0xe0] sm:$0xff]
          %v705 = vld [vmem:[#allocation2 + $0xe8] sm:$0xff]
          %v706 = vld [vmem:[#allocation2 + $0xf0] sm:$0xff]
          %v707 = vld [vmem:[#allocation2 + $0xf8] sm:$0xff]
          %v708 = vld [vmem:[%s258] sm:$0x1]
          %v710 = vperm.slane %v708, 0
          %v712 = vadd.f32 %v676, %v710
          %v713 = vadd.f32 %v677, %v710
          %v714 = vadd.f32 %v678, %v710
          %v715 = vadd.f32 %v679, %v710
          %v716 = vadd.f32 %v680, %v710
          %v717 = vadd.f32 %v681, %v710
          %v718 = vadd.f32 %v682, %v710
          %v719 = vadd.f32 %v683, %v710
          %v720 = vadd.f32 %v684, %v710
          %v721 = vadd.f32 %v685, %v710
          %v722 = vadd.f32 %v686, %v710
          %v723 = vadd.f32 %v687, %v710
          %v724 = vadd.f32 %v688, %v710
          %v725 = vadd.f32 %v689, %v710
          %v726 = vadd.f32 %v690, %v710
          %v727 = vadd.f32 %v691, %v710
          %v728 = vadd.f32 %v692, %v710
          %v729 = vadd.f32 %v693, %v710
          %v730 = vadd.f32 %v694, %v710
          %v731 = vadd.f32 %v695, %v710
          %v732 = vadd.f32 %v696, %v710
          %v733 = vadd.f32 %v697, %v710
          %v734 = vadd.f32 %v698, %v710
          %v735 = vadd.f32 %v699, %v710
          %v736 = vadd.f32 %v700, %v710
          %v737 = vadd.f32 %v701, %v710
          %v738 = vadd.f32 %v702, %v710
          %v739 = vadd.f32 %v703, %v710
          %v740 = vadd.f32 %v704, %v710
          %v741 = vadd.f32 %v705, %v710
          %v742 = vadd.f32 %v706, %v710
          %v743 = vadd.f32 %v707, %v710
          %v744 = vsub.f32 0.0, %v712
          %v745 = vsub.f32 0.0, %v713
          %v746 = vsub.f32 0.0, %v714
          %v747 = vsub.f32 0.0, %v715
          %v748 = vsub.f32 0.0, %v716
          %v749 = vsub.f32 0.0, %v717
          %v750 = vsub.f32 0.0, %v718
          %v751 = vsub.f32 0.0, %v719
          %v752 = vsub.f32 0.0, %v720
          %v753 = vsub.f32 0.0, %v721
          %v754 = vsub.f32 0.0, %v722
          %v755 = vsub.f32 0.0, %v723
          %v756 = vsub.f32 0.0, %v724
          %v757 = vsub.f32 0.0, %v725
          %v758 = vsub.f32 0.0, %v726
          %v759 = vsub.f32 0.0, %v727
          %v760 = vsub.f32 0.0, %v728
          %v761 = vsub.f32 0.0, %v729
          %v762 = vsub.f32 0.0, %v730
          %v763 = vsub.f32 0.0, %v731
          %v764 = vsub.f32 0.0, %v732
          %v765 = vsub.f32 0.0, %v733
          %v766 = vsub.f32 0.0, %v734
          %v767 = vsub.f32 0.0, %v735
          %v768 = vsub.f32 0.0, %v736
          %v769 = vsub.f32 0.0, %v737
          %v770 = vsub.f32 0.0, %v738
          %v771 = vsub.f32 0.0, %v739
          %v772 = vsub.f32 0.0, %v740
          %v773 = vsub.f32 0.0, %v741
          %v774 = vsub.f32 0.0, %v742
          %v775 = vsub.f32 0.0, %v743
          %v776 = vmul.f32 %v744, 1.442695
          %v777 = vpow.pop %v776
          %v778 = vmul.f32 %v745, 1.442695
          %v779 = vpow.pop %v778
          %v780 = vmul.f32 %v746, 1.442695
          %v781 = vpow.pop %v780
          %v782 = vmul.f32 %v747, 1.442695
          %v783 = vpow.pop %v782
          %v784 = vmul.f32 %v748, 1.442695
          %v785 = vpow.pop %v784
          %v786 = vmul.f32 %v749, 1.442695
          %v787 = vpow.pop %v786
          %v788 = vmul.f32 %v750, 1.442695
          %v789 = vpow.pop %v788
          %v790 = vmul.f32 %v751, 1.442695
          %v791 = vpow.pop %v790
          %v792 = vmul.f32 %v752, 1.442695
          %v793 = vpow.pop %v792
          %v794 = vmul.f32 %v753, 1.442695
          %v795 = vpow.pop %v794
          %v796 = vmul.f32 %v754, 1.442695
          %v797 = vpow.pop %v796
          %v798 = vmul.f32 %v755, 1.442695
          %v799 = vpow.pop %v798
          %v800 = vmul.f32 %v756, 1.442695
          %v801 = vpow.pop %v800
          %v802 = vmul.f32 %v757, 1.442695
          %v803 = vpow.pop %v802
          %v804 = vmul.f32 %v758, 1.442695
          %v805 = vpow.pop %v804
          %v806 = vmul.f32 %v759, 1.442695
          %v807 = vpow.pop %v806
          %v808 = vmul.f32 %v760, 1.442695
          %v809 = vpow.pop %v808
          %v810 = vmul.f32 %v761, 1.442695
          %v811 = vpow.pop %v810
          %v812 = vmul.f32 %v762, 1.442695
          %v813 = vpow.pop %v812
          %v814 = vmul.f32 %v763, 1.442695
          %v815 = vpow.pop %v814
          %v816 = vmul.f32 %v764, 1.442695
          %v817 = vpow.pop %v816
          %v818 = vmul.f32 %v765, 1.442695
          %v819 = vpow.pop %v818
          %v820 = vmul.f32 %v766, 1.442695
          %v821 = vpow.pop %v820
          %v822 = vmul.f32 %v767, 1.442695
          %v823 = vpow.pop %v822
          %v824 = vmul.f32 %v768, 1.442695
          %v825 = vpow.pop %v824
          %v826 = vmul.f32 %v769, 1.442695
          %v827 = vpow.pop %v826
          %v828 = vmul.f32 %v770, 1.442695
          %v829 = vpow.pop %v828
          %v830 = vmul.f32 %v771, 1.442695
          %v831 = vpow.pop %v830
          %v832 = vmul.f32 %v772, 1.442695
          %v833 = vpow.pop %v832
          %v834 = vmul.f32 %v773, 1.442695
          %v835 = vpow.pop %v834
          %v836 = vmul.f32 %v774, 1.442695
          %v837 = vpow.pop %v836
          %v838 = vmul.f32 %v775, 1.442695
          %v839 = vpow.pop %v838
          %v840 = vadd.f32 %v777, 1.0
          %v841 = vadd.f32 %v779, 1.0
          %v842 = vadd.f32 %v781, 1.0
          %v843 = vadd.f32 %v783, 1.0
          %v844 = vadd.f32 %v785, 1.0
          %v845 = vadd.f32 %v787, 1.0
          %v846 = vadd.f32 %v789, 1.0
          %v847 = vadd.f32 %v791, 1.0
          %v848 = vadd.f32 %v793, 1.0
          %v849 = vadd.f32 %v795, 1.0
          %v850 = vadd.f32 %v797, 1.0
          %v851 = vadd.f32 %v799, 1.0
          %v852 = vadd.f32 %v801, 1.0
          %v853 = vadd.f32 %v803, 1.0
          %v854 = vadd.f32 %v805, 1.0
          %v855 = vadd.f32 %v807, 1.0
          %v856 = vadd.f32 %v809, 1.0
          %v857 = vadd.f32 %v811, 1.0
          %v858 = vadd.f32 %v813, 1.0
          %v859 = vadd.f32 %v815, 1.0
          %v860 = vadd.f32 %v817, 1.0
          %v861 = vadd.f32 %v819, 1.0
          %v862 = vadd.f32 %v821, 1.0
          %v863 = vadd.f32 %v823, 1.0
          %v864 = vadd.f32 %v825, 1.0
          %v865 = vadd.f32 %v827, 1.0
          %v866 = vadd.f32 %v829, 1.0
          %v867 = vadd.f32 %v831, 1.0
          %v868 = vadd.f32 %v833, 1.0
          %v869 = vadd.f32 %v835, 1.0
          %v870 = vadd.f32 %v837, 1.0
          %v871 = vadd.f32 %v839, 1.0
          %v872 = vrcp.pop %v840
          %v873 = vrcp.pop %v841
          %v874 = vrcp.pop %v842
          %v875 = vrcp.pop %v843
          %v876 = vrcp.pop %v844
          %v877 = vrcp.pop %v845
          %v878 = vrcp.pop %v846
          %v879 = vrcp.pop %v847
          %v880 = vrcp.pop %v848
          %v881 = vrcp.pop %v849
          %v882 = vrcp.pop %v850
          %v883 = vrcp.pop %v851
          %v884 = vrcp.pop %v852
          %v885 = vrcp.pop %v853
          %v886 = vrcp.pop %v854
          %v887 = vrcp.pop %v855
          %v888 = vrcp.pop %v856
          %v889 = vrcp.pop %v857
          %v890 = vrcp.pop %v858
          %v891 = vrcp.pop %v859
          %v892 = vrcp.pop %v860
          %v893 = vrcp.pop %v861
          %v894 = vrcp.pop %v862
          %v895 = vrcp.pop %v863
          %v896 = vrcp.pop %v864
          %v897 = vrcp.pop %v865
          %v898 = vrcp.pop %v866
          %v899 = vrcp.pop %v867
          %v900 = vrcp.pop %v868
          %v901 = vrcp.pop %v869
          %v902 = vrcp.pop %v870
          %v903 = vrcp.pop %v871
          %v904 = vmul.f32 %v712, %v872
          %v905 = vmul.f32 %v713, %v873
          %v906 = vmul.f32 %v714, %v874
          %v907 = vmul.f32 %v715, %v875
          %v908 = vmul.f32 %v716, %v876
          %v909 = vmul.f32 %v717, %v877
          %v910 = vmul.f32 %v718, %v878
          %v911 = vmul.f32 %v719, %v879
          %v912 = vmul.f32 %v720, %v880
          %v913 = vmul.f32 %v721, %v881
          %v914 = vmul.f32 %v722, %v882
          %v915 = vmul.f32 %v723, %v883
          %v916 = vmul.f32 %v724, %v884
          %v917 = vmul.f32 %v725, %v885
          %v918 = vmul.f32 %v726, %v886
          %v919 = vmul.f32 %v727, %v887
          %v920 = vmul.f32 %v728, %v888
          %v921 = vmul.f32 %v729, %v889
          %v922 = vmul.f32 %v730, %v890
          %v923 = vmul.f32 %v731, %v891
          %v924 = vmul.f32 %v732, %v892
          %v925 = vmul.f32 %v733, %v893
          %v926 = vmul.f32 %v734, %v894
          %v927 = vmul.f32 %v735, %v895
          %v928 = vmul.f32 %v736, %v896
          %v929 = vmul.f32 %v737, %v897
          %v930 = vmul.f32 %v738, %v898
          %v931 = vmul.f32 %v739, %v899
          %v932 = vmul.f32 %v740, %v900
          %v933 = vmul.f32 %v741, %v901
          %v934 = vmul.f32 %v742, %v902
          %v935 = vmul.f32 %v743, %v903
          %v936 = vpack.c.bf16 %v904, %v904
          %v937 = vpack.c.bf16 %v905, %v905
          %v938 = vpack.c.bf16 %v906, %v906
          %v939 = vpack.c.bf16 %v907, %v907
          %v940 = vpack.c.bf16 %v908, %v908
          %v941 = vpack.c.bf16 %v909, %v909
          %v942 = vpack.c.bf16 %v910, %v910
          %v943 = vpack.c.bf16 %v911, %v911
          %v944 = vpack.c.bf16 %v912, %v912
          %v945 = vpack.c.bf16 %v913, %v913
          %v946 = vpack.c.bf16 %v914, %v914
          %v947 = vpack.c.bf16 %v915, %v915
          %v948 = vpack.c.bf16 %v916, %v916
          %v949 = vpack.c.bf16 %v917, %v917
          %v950 = vpack.c.bf16 %v918, %v918
          %v951 = vpack.c.bf16 %v919, %v919
          %v952 = vpack.c.bf16 %v920, %v920
          %v953 = vpack.c.bf16 %v921, %v921
          %v954 = vpack.c.bf16 %v922, %v922
          %v955 = vpack.c.bf16 %v923, %v923
          %v956 = vpack.c.bf16 %v924, %v924
          %v957 = vpack.c.bf16 %v925, %v925
          %v958 = vpack.c.bf16 %v926, %v926
          %v959 = vpack.c.bf16 %v927, %v927
          %v960 = vpack.c.bf16 %v928, %v928
          %v961 = vpack.c.bf16 %v929, %v929
          %v962 = vpack.c.bf16 %v930, %v930
          %v963 = vpack.c.bf16 %v931, %v931
          %v964 = vpack.c.bf16 %v932, %v932
          %v965 = vpack.c.bf16 %v933, %v933
          %v966 = vpack.c.bf16 %v934, %v934
          %v967 = vpack.c.bf16 %v935, %v935
          %968 = vst [vmem:[%s253] sm:$0xf] %v936
          %969 = vst [vmem:[%s253 + $0x4] sm:$0xf] %v937
          %970 = vst [vmem:[%s253 + $0x8] sm:$0xf] %v938
          %971 = vst [vmem:[%s253 + $0xc] sm:$0xf] %v939
          %972 = vst [vmem:[%s253 + $0x10] sm:$0xf] %v940
          %973 = vst [vmem:[%s253 + $0x14] sm:$0xf] %v941
          %974 = vst [vmem:[%s253 + $0x18] sm:$0xf] %v942
          %975 = vst [vmem:[%s253 + $0x1c] sm:$0xf] %v943
          %976 = vst [vmem:[%s253 + $0x20] sm:$0xf] %v944
          %977 = vst [vmem:[%s253 + $0x24] sm:$0xf] %v945
          %978 = vst [vmem:[%s253 + $0x28] sm:$0xf] %v946
          %979 = vst [vmem:[%s253 + $0x2c] sm:$0xf] %v947
          %980 = vst [vmem:[%s253 + $0x30] sm:$0xf] %v948
          %981 = vst [vmem:[%s253 + $0x34] sm:$0xf] %v949
          %982 = vst [vmem:[%s253 + $0x38] sm:$0xf] %v950
          %983 = vst [vmem:[%s253 + $0x3c] sm:$0xf] %v951
          %984 = vst [vmem:[%s253 + $0x40] sm:$0xf] %v952
          %985 = vst [vmem:[%s253 + $0x44] sm:$0xf] %v953
          %986 = vst [vmem:[%s253 + $0x48] sm:$0xf] %v954
          %987 = vst [vmem:[%s253 + $0x4c] sm:$0xf] %v955
          %988 = vst [vmem:[%s253 + $0x50] sm:$0xf] %v956
          %989 = vst [vmem:[%s253 + $0x54] sm:$0xf] %v957
          %990 = vst [vmem:[%s253 + $0x58] sm:$0xf] %v958
          %991 = vst [vmem:[%s253 + $0x5c] sm:$0xf] %v959
          %992 = vst [vmem:[%s253 + $0x60] sm:$0xf] %v960
          %993 = vst [vmem:[%s253 + $0x64] sm:$0xf] %v961
          %994 = vst [vmem:[%s253 + $0x68] sm:$0xf] %v962
          %995 = vst [vmem:[%s253 + $0x6c] sm:$0xf] %v963
          %996 = vst [vmem:[%s253 + $0x70] sm:$0xf] %v964
          %997 = vst [vmem:[%s253 + $0x74] sm:$0xf] %v965
          %998 = vst [vmem:[%s253 + $0x78] sm:$0xf] %v966
          %999 = vst [vmem:[%s253 + $0x7c] sm:$0xf] %v967
        $region48: #{tpu_custom_call.1} parent=31 // pred_fallthru
          _
        %s1000 = sand.u32 %s132, 1
        %s1001 = scalar_lea.sflag [#allocation5], %s1000
        %s1002 = sand.u32 %s132, 1
        %s1003 = smul.addr %s1002, 128
        %s1004 = scalar_lea.vmem [#allocation8], %s1003
        // Predicated region
        $region49: #{tpu_custom_call.1} parent=31 // pred_check
          %p1005 = pneg %p142
        $region50: #{tpu_custom_call.1} parent=31 // pred_check_branch
          %1007 = sbr.rel (%p1005) target = $region52
        $region51: #{tpu_custom_call.1} parent=31 // pred_region
          %s1008 = smul.u32 32, %s26
          %1010 = vsyncadd %s1001, 0
          %s1011 = sadd.s32 %s27, %s1008
          %s1012 = smul.addr %s1011, 4
          %s1013 = scalar_lea.hbm %s3, %s1012
          %s1014 = sshll.u32 %s1004, 4
          %s1015 = int_to_ptr.vmem [resolvable:$true] %s1014
          %s1016 = sshll.u32 %s1013, 4
          %s1017 = int_to_ptr.hbm [resolvable:$true] %s1016
          %1022 = dma.vmem_to_hbm [thread:$0]  %s1015, 2048, %s1017, %s1001, 64, 64, 4
        $region52: #{tpu_custom_call.1} parent=31 // pred_fallthru
          _
      $region32: #{tpu_custom_call.1} parent=5 // pred_fallthru
        _
      %p1023 = scmp.le.s32.totalorder 2, %s16
      // Predicated region
      $region53: #{tpu_custom_call.1} parent=5 // pred_check
        %p1024 = pneg %p1023
      $region54: #{tpu_custom_call.1} parent=5 // pred_check_branch
        %1026 = sbr.rel (%p1024) target = $region56
      $region55: #{tpu_custom_call.1} parent=5 // pred_region
        %s1027 = ssub.s32 %s16, 2
        // Predicated region
        $region57: #{tpu_custom_call.1} parent=55 // pred_check
          %p1028 = pneg %p148
        $region58: #{tpu_custom_call.1} parent=55 // pred_check_branch
          %1030 = sbr.rel (%p1028) target = $region60
        $region59: #{tpu_custom_call.1} parent=55 // pred_region
          %s1031 = sand.u32 %s133, 1
          %s1032 = scalar_lea.sflag [#allocation5], %s1031
          %s1033 = sand.u32 %s133, 1
          %s1034 = smul.addr %s1033, 128
          %s1035 = scalar_lea.vmem [#allocation8], %s1034
          %1037 = dma.done %s1032, 2048
        $region60: #{tpu_custom_call.1} parent=55 // pred_fallthru
          _
      $region56: #{tpu_custom_call.1} parent=5 // pred_fallthru
        _
    $region6: #{tpu_custom_call.1} parent=1 // loop_footer
      %s20 = sadd.s32 1, %s16
    $region7: #{tpu_custom_call.1} parent=1 // loop_footer_branch
      %15 = sbr.rel target = $region3
    $region8: #{tpu_custom_call.1} parent=1 // loop_exit
      _
    %1038 = vsyncpa [#allocation4], 1
    %s1039 = scalar_lea.sflag [#allocation4], 1
    %1040 = vsyncpa %s1039, 1
    %1041 = vsyncpa [#allocation7], 1
    %1042 = vsyncpa [#allocation5], 1
    %s1043 = scalar_lea.sflag [#allocation5], 1
    %1044 = vsyncpa %s1043, 1

</llo_original>
